<compile_context>
chip_gen: v7x
topology: tpu7x:2x2x1
jax: 0.10.0
libtpu: 0.0.40
codegen_flags: <defaults>
</compile_context>

<pallas_src>
import functools

import jax
import jax.numpy as jnp
from jax.experimental import pallas as pl
from jax.experimental.pallas import tpu as pltpu


def convlstm_cell_kernel(x_ref, h_ref, wx_ref, wh_ref, b_ref, c_ref, out_ref,
                         *, hidden_channels, kernel_size, seq_len):
    """One batch element of the ConvLSTM cell step.

    x_ref  : (L+K-1, Cx)   bf16  zero-padded input sequence (lanes = channels)
    h_ref  : (L+K-1, H)    bf16  zero-padded previous hidden state
    wx_ref : (K, Cx, 4H)   bf16  per-tap input->gate weights (0.5 folded into i/f/o)
    wh_ref : (K, H, 4H)    bf16  per-tap hidden->gate weights (same fold)
    b_ref  : (1, 4H)       f32   conv bias (same fold)
    c_ref  : (L, H)        f32   previous cell state
    out_ref: (L, 2H)       f32   fused [h_next | c_next], single lane-dense store
    """
    H = hidden_channels
    K = kernel_size
    L = seq_len

    x = x_ref[...]                       # (L+K-1, Cx)
    h = h_ref[...]                       # (L+K-1, H)

    # K-tap "same" convolution as K small MXU matmuls per source, f32 accum.
    # The shifted tap views are VMEM-local slices: no HBM im2col anywhere.
    gates = jnp.zeros((L, 4 * H), jnp.float32)
    for k in range(K):                   # K is small & static -> unrolled
        gates += jnp.dot(x[k:k + L, :], wx_ref[k],
                         preferred_element_type=jnp.float32)
        gates += jnp.dot(h[k:k + L, :], wh_ref[k],
                         preferred_element_type=jnp.float32)
    gates += b_ref[...]                  # broadcast (1, 4H)

    # 0.5 pre-scale for i/f/o already folded into w/b, so one tanh pass over
    # the lane-dense (L, 128) gate array covers all four nonlinearities:
    #   sigmoid(z) = 0.5 * tanh(0.5 * z) + 0.5   (exact identity)
    t = jnp.tanh(gates)
    i = 0.5 * t[:, 0 * H:1 * H] + 0.5
    f = 0.5 * t[:, 1 * H:2 * H] + 0.5
    o = 0.5 * t[:, 2 * H:3 * H] + 0.5
    g = t[:, 3 * H:4 * H]

    c_prev = c_ref[...]
    c_next = f * c_prev + i * g
    h_next = o * jnp.tanh(c_next)

    # One fused 2H-lane store instead of two masked H-lane stores.
    out_ref[...] = jnp.concatenate([h_next, c_next], axis=-1).astype(out_ref.dtype)


def convlstm_cell_1d(x_ncl, h_ncl, c_ncl, weight, bias, *, hidden_channels,
                     kernel_size):
    """Pallas ConvLSTMCell1D forward.

    x_ncl : (B, C_in_x, L)          -- PyTorch NCL layout
    h_ncl : (B, H, L)
    c_ncl : (B, H, L)
    weight: (4H, C_in_x + H, K)     -- PyTorch Conv1d weight layout
    bias  : (4H,)
    Returns (h_next, c_next) in NCL layout, matching the PyTorch module.
    """
    B, Cx, L = x_ncl.shape
    H = hidden_channels
    K = kernel_size
    # padding = K // 2 only reproduces PyTorch "same" length for odd K.
    assert K % 2 == 1, "ConvLSTMCell1D Pallas kernel supports odd kernel_size only"
    pad = K // 2
    L_pad = L + 2 * pad

    # --- plain-JAX glue: layout + zero padding (hoist for a rollout). ---
    x_nlc = jnp.transpose(x_ncl, (0, 2, 1)).astype(jnp.bfloat16)   # (B, L, Cx)
    h_nlc = jnp.transpose(h_ncl, (0, 2, 1)).astype(jnp.bfloat16)   # (B, L, H)
    c_nlc = jnp.transpose(c_ncl, (0, 2, 1)).astype(jnp.float32)    # (B, L, H)
    x_pad = jnp.pad(x_nlc, ((0, 0), (pad, pad), (0, 0)))           # (B, L_pad, Cx)
    h_pad = jnp.pad(h_nlc, ((0, 0), (pad, pad), (0, 0)))           # (B, L_pad, H)

    # PyTorch weight (4H, C_in, K) -> tap-major (K, C_in, 4H), split x|h parts,
    # and fold the 0.5 sigmoid pre-scale into the i/f/o output columns.
    scale = jnp.concatenate([jnp.full((3 * H,), 0.5, jnp.float32),
                             jnp.ones((H,), jnp.float32)])          # (4H,)
    w_t = jnp.transpose(weight, (2, 1, 0)).astype(jnp.float32) * scale
    wx = w_t[:, :Cx, :].astype(jnp.bfloat16)                        # (K, Cx, 4H)
    wh = w_t[:, Cx:, :].astype(jnp.bfloat16)                        # (K, H, 4H)
    b = (bias.astype(jnp.float32) * scale).reshape(1, 4 * H)        # (1, 4H)

    kernel = functools.partial(convlstm_cell_kernel, hidden_channels=H,
                               kernel_size=K, seq_len=L)

    out = pl.pallas_call(
        kernel,
        out_shape=jax.ShapeDtypeStruct((B, L, 2 * H), jnp.float32),
        grid_spec=pltpu.PrefetchScalarGridSpec(
            num_scalar_prefetch=0,
            grid=(B,),
            in_specs=[
                pl.BlockSpec((None, L_pad, Cx), lambda bb: (bb, 0, 0)),
                pl.BlockSpec((None, L_pad, H), lambda bb: (bb, 0, 0)),
                pl.BlockSpec((K, Cx, 4 * H), lambda bb: (0, 0, 0)),   # resident
                pl.BlockSpec((K, H, 4 * H), lambda bb: (0, 0, 0)),    # resident
                pl.BlockSpec((1, 4 * H), lambda bb: (0, 0)),          # resident
                pl.BlockSpec((None, L, H), lambda bb: (bb, 0, 0)),
            ],
            out_specs=pl.BlockSpec((None, L, 2 * H), lambda bb: (bb, 0, 0)),
        ),
        compiler_params=pltpu.CompilerParams(
            dimension_semantics=("parallel",),      # batches independent
            vmem_limit_bytes=48 * 1024 * 1024),     # fits v5e/v6e/v7x budgets
    )(x_pad, h_pad, wx, wh, b, c_nlc)

    # Split fused [h | c] and go back to PyTorch NCL layout.
    h_next = jnp.transpose(out[:, :, :H], (0, 2, 1)).astype(x_ncl.dtype)
    c_next = jnp.transpose(out[:, :, H:], (0, 2, 1)).astype(x_ncl.dtype)
    return h_next, c_next


def _reference(x_ncl, h_ncl, c_ncl, weight, bias, hidden_channels):
    """Pure-JAX f32 reference matching the PyTorch module."""
    combined = jnp.concatenate([x_ncl, h_ncl], axis=1)            # (B, C_in, L)
    pad = weight.shape[-1] // 2
    conv_out = jax.lax.conv_general_dilated(
        combined, weight, window_strides=(1,), padding=[(pad, pad)],
        dimension_numbers=('NCH', 'OIH', 'NCH'))
    conv_out = conv_out + bias[None, :, None]
    H = hidden_channels
    cc_i, cc_f, cc_o, cc_g = (conv_out[:, 0*H:1*H], conv_out[:, 1*H:2*H],
                              conv_out[:, 2*H:3*H], conv_out[:, 3*H:4*H])
    i = jax.nn.sigmoid(cc_i)
    f = jax.nn.sigmoid(cc_f)
    o = jax.nn.sigmoid(cc_o)
    g = jnp.tanh(cc_g)
    c_next = f * c_ncl + i * g
    h_next = o * jnp.tanh(c_next)
    return h_next, c_next


if __name__ == "__main__":
    # Small shapes consistent with the module's forward.
    B = 2                 # batch
    C_IN = 4              # input channels
    H = 32                # hidden channels
    L = 16                # sequence length (1D spatial dim)
    K = 3                 # conv kernel size

    key = jax.random.PRNGKey(0)
    kx, kh, kc, kw, kb = jax.random.split(key, 5)

    x = jax.random.normal(kx, (B, C_IN, L), dtype=jnp.float32)
    h_cur = jax.random.normal(kh, (B, H, L), dtype=jnp.float32)
    c_cur = jax.random.normal(kc, (B, H, L), dtype=jnp.float32)

    # Deterministic synthetic parameters (PyTorch Conv1d shapes).
    fan_in = (C_IN + H) * K
    bound = 1.0 / (fan_in ** 0.5)
    weight = jax.random.uniform(kw, (4 * H, C_IN + H, K),
                                minval=-bound, maxval=bound, dtype=jnp.float32)
    bias = jax.random.uniform(kb, (4 * H,),
                              minval=-bound, maxval=bound, dtype=jnp.float32)

    h_next, c_next = convlstm_cell_1d(x, h_cur, c_cur, weight, bias,
                                      hidden_channels=H, kernel_size=K)
    jax.block_until_ready((h_next, c_next))

    h_ref, c_ref = _reference(x, h_cur, c_cur, weight, bias, H)
    # bf16 matmul operands (f32 accumulation) -> loosened tolerance vs f32 ref.
    assert h_next.shape == (B, H, L) and c_next.shape == (B, H, L)
    assert jnp.allclose(h_next, h_ref, atol=2e-2, rtol=2e-2), "h_next mismatch"
    assert jnp.allclose(c_next, c_ref, atol=2e-2, rtol=2e-2), "c_next mismatch"

    print("KERNEL_OK")
</pallas_src>

<mosaic_0001>
module attributes {stable_mosaic.version = 11 : i64} {
  func.func @convlstm_cell_kernel(%arg0: i32, %arg1: memref<1x18x4xbf16, #tpu.memory_space<vmem>>, %arg2: memref<1x18x32xbf16, #tpu.memory_space<vmem>>, %arg3: memref<3x4x128xbf16, #tpu.memory_space<vmem>>, %arg4: memref<3x32x128xbf16, #tpu.memory_space<vmem>>, %arg5: memref<1x128xf32, #tpu.memory_space<vmem>>, %arg6: memref<1x16x32xf32, #tpu.memory_space<vmem>>, %arg7: memref<1x16x64xf32, #tpu.memory_space<vmem>>) attributes {dimension_semantics = [#tpu.dimension_semantics<parallel>], iteration_bounds = array<i64: 2>, scalar_prefetch = 0 : i64, scratch_operands = 0 : i64, tpu.core_type = #tpu.core_type<tc>, window_params = [{transform_indices = @transform_0, window_bounds = array<i64: 1, 18, 4>}, {transform_indices = @transform_1, window_bounds = array<i64: 1, 18, 32>}, {pipeline_mode = #tpu.pipeline_mode<synchronous>, transform_indices = @transform_2, window_bounds = array<i64: 3, 4, 128>}, {pipeline_mode = #tpu.pipeline_mode<synchronous>, transform_indices = @transform_3, window_bounds = array<i64: 3, 32, 128>}, {pipeline_mode = #tpu.pipeline_mode<synchronous>, transform_indices = @transform_4, window_bounds = array<i64: 1, 128>}, {transform_indices = @transform_5, window_bounds = array<i64: 1, 16, 32>}, {transform_indices = @transform_6, window_bounds = array<i64: 1, 16, 64>}]} {
    %c0 = arith.constant 0 : index
    %c0_0 = arith.constant 0 : index
    %c0_1 = arith.constant 0 : index
    %0 = vector.load %arg1[%c0, %c0_0, %c0_1] : memref<1x18x4xbf16, #tpu.memory_space<vmem>>, vector<1x18x4xbf16>
    %1 = vector.shape_cast %0 : vector<1x18x4xbf16> to vector<18x4xbf16>
    %c0_2 = arith.constant 0 : index
    %c0_3 = arith.constant 0 : index
    %c0_4 = arith.constant 0 : index
    %2 = vector.load %arg2[%c0_2, %c0_3, %c0_4] : memref<1x18x32xbf16, #tpu.memory_space<vmem>>, vector<1x18x32xbf16>
    %3 = vector.shape_cast %2 : vector<1x18x32xbf16> to vector<18x32xbf16>
    %cst = arith.constant 0.000000e+00 : f32
    %4 = vector.broadcast %cst : f32 to vector<16x128xf32>
    %5 = vector.extract_strided_slice %1 {offsets = [0, 0], sizes = [16, 4], strides = [1, 1]} : vector<18x4xbf16> to vector<16x4xbf16>
    %c0_5 = arith.constant 0 : index
    %c0_6 = arith.constant 0 : index
    %c0_7 = arith.constant 0 : index
    %6 = vector.load %arg3[%c0_5, %c0_6, %c0_7] : memref<3x4x128xbf16, #tpu.memory_space<vmem>>, vector<1x4x128xbf16>
    %7 = vector.shape_cast %6 : vector<1x4x128xbf16> to vector<4x128xbf16>
    %cst_8 = arith.constant dense<0.000000e+00> : vector<16x128xf32>
    %8 = tpu.matmul %5, %7, %cst_8 {dimension_numbers = #tpu.dot_dimension_numbers<[1], [0], [0], [1], [0, 0, 1, 1], [], []>} : vector<16x4xbf16>, vector<4x128xbf16>, vector<16x128xf32> -> vector<16x128xf32>
    %9 = arith.addf %4, %8 : vector<16x128xf32>
    %10 = vector.extract_strided_slice %3 {offsets = [0, 0], sizes = [16, 32], strides = [1, 1]} : vector<18x32xbf16> to vector<16x32xbf16>
    %c0_9 = arith.constant 0 : index
    %c0_10 = arith.constant 0 : index
    %c0_11 = arith.constant 0 : index
    %11 = vector.load %arg4[%c0_9, %c0_10, %c0_11] : memref<3x32x128xbf16, #tpu.memory_space<vmem>>, vector<1x32x128xbf16>
    %12 = vector.shape_cast %11 : vector<1x32x128xbf16> to vector<32x128xbf16>
    %cst_12 = arith.constant dense<0.000000e+00> : vector<16x128xf32>
    %13 = tpu.matmul %10, %12, %cst_12 {dimension_numbers = #tpu.dot_dimension_numbers<[1], [0], [0], [1], [0, 0, 1, 1], [], []>} : vector<16x32xbf16>, vector<32x128xbf16>, vector<16x128xf32> -> vector<16x128xf32>
    %14 = arith.addf %9, %13 : vector<16x128xf32>
    %15 = vector.extract_strided_slice %1 {offsets = [1, 0], sizes = [16, 4], strides = [1, 1]} : vector<18x4xbf16> to vector<16x4xbf16>
    %c1 = arith.constant 1 : index
    %c0_13 = arith.constant 0 : index
    %c0_14 = arith.constant 0 : index
    %16 = vector.load %arg3[%c1, %c0_13, %c0_14] : memref<3x4x128xbf16, #tpu.memory_space<vmem>>, vector<1x4x128xbf16>
    %17 = vector.shape_cast %16 : vector<1x4x128xbf16> to vector<4x128xbf16>
    %cst_15 = arith.constant dense<0.000000e+00> : vector<16x128xf32>
    %18 = tpu.matmul %15, %17, %cst_15 {dimension_numbers = #tpu.dot_dimension_numbers<[1], [0], [0], [1], [0, 0, 1, 1], [], []>} : vector<16x4xbf16>, vector<4x128xbf16>, vector<16x128xf32> -> vector<16x128xf32>
    %19 = arith.addf %14, %18 : vector<16x128xf32>
    %20 = vector.extract_strided_slice %3 {offsets = [1, 0], sizes = [16, 32], strides = [1, 1]} : vector<18x32xbf16> to vector<16x32xbf16>
    %c1_16 = arith.constant 1 : index
    %c0_17 = arith.constant 0 : index
    %c0_18 = arith.constant 0 : index
    %21 = vector.load %arg4[%c1_16, %c0_17, %c0_18] : memref<3x32x128xbf16, #tpu.memory_space<vmem>>, vector<1x32x128xbf16>
    %22 = vector.shape_cast %21 : vector<1x32x128xbf16> to vector<32x128xbf16>
    %cst_19 = arith.constant dense<0.000000e+00> : vector<16x128xf32>
    %23 = tpu.matmul %20, %22, %cst_19 {dimension_numbers = #tpu.dot_dimension_numbers<[1], [0], [0], [1], [0, 0, 1, 1], [], []>} : vector<16x32xbf16>, vector<32x128xbf16>, vector<16x128xf32> -> vector<16x128xf32>
    %24 = arith.addf %19, %23 : vector<16x128xf32>
    %25 = vector.extract_strided_slice %1 {offsets = [2, 0], sizes = [16, 4], strides = [1, 1]} : vector<18x4xbf16> to vector<16x4xbf16>
    %c2 = arith.constant 2 : index
    %c0_20 = arith.constant 0 : index
    %c0_21 = arith.constant 0 : index
    %26 = vector.load %arg3[%c2, %c0_20, %c0_21] : memref<3x4x128xbf16, #tpu.memory_space<vmem>>, vector<1x4x128xbf16>
    %27 = vector.shape_cast %26 : vector<1x4x128xbf16> to vector<4x128xbf16>
    %cst_22 = arith.constant dense<0.000000e+00> : vector<16x128xf32>
    %28 = tpu.matmul %25, %27, %cst_22 {dimension_numbers = #tpu.dot_dimension_numbers<[1], [0], [0], [1], [0, 0, 1, 1], [], []>} : vector<16x4xbf16>, vector<4x128xbf16>, vector<16x128xf32> -> vector<16x128xf32>
    %29 = arith.addf %24, %28 : vector<16x128xf32>
    %30 = vector.extract_strided_slice %3 {offsets = [2, 0], sizes = [16, 32], strides = [1, 1]} : vector<18x32xbf16> to vector<16x32xbf16>
    %c2_23 = arith.constant 2 : index
    %c0_24 = arith.constant 0 : index
    %c0_25 = arith.constant 0 : index
    %31 = vector.load %arg4[%c2_23, %c0_24, %c0_25] : memref<3x32x128xbf16, #tpu.memory_space<vmem>>, vector<1x32x128xbf16>
    %32 = vector.shape_cast %31 : vector<1x32x128xbf16> to vector<32x128xbf16>
    %cst_26 = arith.constant dense<0.000000e+00> : vector<16x128xf32>
    %33 = tpu.matmul %30, %32, %cst_26 {dimension_numbers = #tpu.dot_dimension_numbers<[1], [0], [0], [1], [0, 0, 1, 1], [], []>} : vector<16x32xbf16>, vector<32x128xbf16>, vector<16x128xf32> -> vector<16x128xf32>
    %34 = arith.addf %29, %33 : vector<16x128xf32>
    %c0_27 = arith.constant 0 : index
    %c0_28 = arith.constant 0 : index
    %35 = vector.load %arg5[%c0_27, %c0_28] : memref<1x128xf32, #tpu.memory_space<vmem>>, vector<1x128xf32>
    %36 = vector.broadcast %35 : vector<1x128xf32> to vector<16x128xf32>
    %37 = arith.addf %34, %36 : vector<16x128xf32>
    %38 = math.tanh %37 : vector<16x128xf32>
    %39 = vector.extract_strided_slice %38 {offsets = [0, 0], sizes = [16, 32], strides = [1, 1]} : vector<16x128xf32> to vector<16x32xf32>
    %cst_29 = arith.constant 5.000000e-01 : f32
    %40 = vector.broadcast %cst_29 : f32 to vector<16x32xf32>
    %41 = arith.mulf %40, %39 : vector<16x32xf32>
    %cst_30 = arith.constant 5.000000e-01 : f32
    %42 = vector.broadcast %cst_30 : f32 to vector<16x32xf32>
    %43 = arith.addf %41, %42 : vector<16x32xf32>
    %44 = vector.extract_strided_slice %38 {offsets = [0, 32], sizes = [16, 32], strides = [1, 1]} : vector<16x128xf32> to vector<16x32xf32>
    %cst_31 = arith.constant 5.000000e-01 : f32
    %45 = vector.broadcast %cst_31 : f32 to vector<16x32xf32>
    %46 = arith.mulf %45, %44 : vector<16x32xf32>
    %cst_32 = arith.constant 5.000000e-01 : f32
    %47 = vector.broadcast %cst_32 : f32 to vector<16x32xf32>
    %48 = arith.addf %46, %47 : vector<16x32xf32>
    %49 = vector.extract_strided_slice %38 {offsets = [0, 64], sizes = [16, 32], strides = [1, 1]} : vector<16x128xf32> to vector<16x32xf32>
    %cst_33 = arith.constant 5.000000e-01 : f32
    %50 = vector.broadcast %cst_33 : f32 to vector<16x32xf32>
    %51 = arith.mulf %50, %49 : vector<16x32xf32>
    %cst_34 = arith.constant 5.000000e-01 : f32
    %52 = vector.broadcast %cst_34 : f32 to vector<16x32xf32>
    %53 = arith.addf %51, %52 : vector<16x32xf32>
    %54 = vector.extract_strided_slice %38 {offsets = [0, 96], sizes = [16, 32], strides = [1, 1]} : vector<16x128xf32> to vector<16x32xf32>
    %c0_35 = arith.constant 0 : index
    %c0_36 = arith.constant 0 : index
    %c0_37 = arith.constant 0 : index
    %55 = vector.load %arg6[%c0_35, %c0_36, %c0_37] : memref<1x16x32xf32, #tpu.memory_space<vmem>>, vector<1x16x32xf32>
    %56 = vector.shape_cast %55 : vector<1x16x32xf32> to vector<16x32xf32>
    %57 = arith.mulf %48, %56 : vector<16x32xf32>
    %58 = arith.mulf %43, %54 : vector<16x32xf32>
    %59 = arith.addf %57, %58 : vector<16x32xf32>
    %60 = math.tanh %59 : vector<16x32xf32>
    %61 = arith.mulf %53, %60 : vector<16x32xf32>
    %62 = tpu.concatenate %61, %59 in 1 : vector<16x32xf32>, vector<16x32xf32> -> vector<16x64xf32>
    %c0_38 = arith.constant 0 : index
    %c0_39 = arith.constant 0 : index
    %c0_40 = arith.constant 0 : index
    %63 = vector.load %arg7[%c0_38, %c0_39, %c0_40] : memref<1x16x64xf32, #tpu.memory_space<vmem>>, vector<1x16x64xf32>
    %64 = vector.shape_cast %63 : vector<1x16x64xf32> to vector<16x64xf32>
    %65 = vector.shape_cast %62 : vector<16x64xf32> to vector<1x16x64xf32>
    tpu.vector_store %arg7[%c0_38, %c0_39, %c0_40], %65 {strides = array<i32>} : memref<1x16x64xf32, #tpu.memory_space<vmem>>, vector<1x16x64xf32>,
    return
  }
  func.func @transform_0(%arg0: i32) -> (i32, i32, i32) {
    %c0_i32 = arith.constant 0 : i32
    %c0_i32_0 = arith.constant 0 : i32
    %c0_i32_1 = arith.constant 0 : i32
    return %arg0, %c0_i32, %c0_i32_0 : i32, i32, i32
  }
  func.func @transform_1(%arg0: i32) -> (i32, i32, i32) {
    %c0_i32 = arith.constant 0 : i32
    %c0_i32_0 = arith.constant 0 : i32
    %c0_i32_1 = arith.constant 0 : i32
    return %arg0, %c0_i32, %c0_i32_0 : i32, i32, i32
  }
  func.func @transform_2(%arg0: i32) -> (i32, i32, i32) {
    %c0_i32 = arith.constant 0 : i32
    %c0_i32_0 = arith.constant 0 : i32
    %c0_i32_1 = arith.constant 0 : i32
    %c0_i32_2 = arith.constant 0 : i32
    return %c0_i32, %c0_i32_0, %c0_i32_1 : i32, i32, i32
  }
  func.func @transform_3(%arg0: i32) -> (i32, i32, i32) {
    %c0_i32 = arith.constant 0 : i32
    %c0_i32_0 = arith.constant 0 : i32
    %c0_i32_1 = arith.constant 0 : i32
    %c0_i32_2 = arith.constant 0 : i32
    return %c0_i32, %c0_i32_0, %c0_i32_1 : i32, i32, i32
  }
  func.func @transform_4(%arg0: i32) -> (i32, i32) {
    %c0_i32 = arith.constant 0 : i32
    %c0_i32_0 = arith.constant 0 : i32
    %c0_i32_1 = arith.constant 0 : i32
    return %c0_i32, %c0_i32_0 : i32, i32
  }
  func.func @transform_5(%arg0: i32) -> (i32, i32, i32) {
    %c0_i32 = arith.constant 0 : i32
    %c0_i32_0 = arith.constant 0 : i32
    %c0_i32_1 = arith.constant 0 : i32
    return %arg0, %c0_i32, %c0_i32_0 : i32, i32, i32
  }
  func.func @transform_6(%arg0: i32) -> (i32, i32, i32) {
    %c0_i32 = arith.constant 0 : i32
    %c0_i32_0 = arith.constant 0 : i32
    %c0_i32_1 = arith.constant 0 : i32
    return %arg0, %c0_i32, %c0_i32_0 : i32, i32, i32
  }
}

</mosaic_0001>

<llo_original>
// kernel: tpu_custom_call.1
$region0: #{tpu_custom_call.1}
  #allocation0 [shape = 'u32[]', space=smem, size = 0x4, offset = 0x4, fixed_abs, tag = 'smem constant byte address 0x4 - core index']
  #allocation1 [shape = 'u32[144,128]{1,0:T(1,128)}', space=vmem, size = 0x12000, scoped, tag = 'internal scratch']
  %s0 = inlined_call_operand.vmem [shape: bf16[2,18,4], index: 0, kind: input, shape index: {}]
  %s1 = inlined_call_operand.vmem [shape: bf16[2,18,32], index: 1, kind: input, shape index: {}]
  %s2 = inlined_call_operand.hbm [shape: bf16[3,4,128], index: 2, kind: input, shape index: {}]
  %s3 = inlined_call_operand.vmem [shape: bf16[3,32,128], index: 3, kind: input, shape index: {}]
  %s4 = inlined_call_operand.vmem [shape: f32[1,128], index: 4, kind: input, shape index: {}]
  %s5 = inlined_call_operand.vmem [shape: f32[2,16,32], index: 5, kind: input, shape index: {}]
  %s6 = inlined_call_operand.hbm [shape: f32[2,16,64], index: 6, kind: output, shape index: {}]
  %s7 = sld [smem:[#allocation0]]
  $region61: #{tpu_custom_call.1} parent=0
    _
  %s9 = ssub.s32 1, %s7
  %s10 = scalar_select 0, %s9, %s7
  $region1: #{tpu_custom_call.1} parent=0
    #allocation2 [shape = 'u8[3072]{0}', space=vmem, size = 0xc00, scoped, tag = 'input window, operand 2, single buffered']
    #allocation3 [shape = 's32[2]{0}', space=sflag, size = 0x8, scoped, tag = 'scoped memory for tpu_custom_call.1']
    #allocation4 [shape = 's32[2]{0}', space=sflag, size = 0x8, scoped, tag = 'scoped memory for tpu_custom_call.1']
    #allocation5 [shape = 'u8[16384]{0}', space=vmem, size = 0x4000, scoped, tag = 'output window, operand 0']
    %11 = vsyncpa [#allocation3], 0
    %12 = vsyncpa [#allocation4], 0
    %s13 = scalar_lea.sflag [#allocation4], 1
    %14 = vsyncpa %s13, 0
    loop: start=0, step=1, limit=4
    $region2: #{tpu_custom_call.1} parent=1 // loop_pre_header
      _
    $region3: #{tpu_custom_call.1} parent=1 // loop_header
      %s16 = sphi 0, %s20
      %p17 = scmp.ge.s32.totalorder %s16, 4
      %s26 = sphi 0, %s28
      %s29 = sphi 0, %s26
      %s30 = sphi 0, %s29
      %s46 = sphi 0, %s30
      %s52 = sphi 0, %s54
      %s55 = sphi 0, %s52
      %s56 = sphi 0, %s55
      %s72 = sphi 0, %s56
      %s76 = sphi 0, %s76
      %s78 = sphi 0, %s76
      %s79 = sphi 0, %s78
      %s93 = sphi 0, %s79
      %s97 = sphi 0, %s97
      %s99 = sphi 0, %s97
      %s100 = sphi 0, %s99
      %s114 = sphi 0, %s100
      %s118 = sphi 0, %s118
      %s120 = sphi 0, %s118
      %s121 = sphi 0, %s120
      %s135 = sphi 0, %s121
      %s141 = sphi 0, %s143
      %s144 = sphi 0, %s141
      %s145 = sphi 0, %s144
      %s161 = sphi 0, %s145
      %s167 = sphi 0, %s169
      %s170 = sphi 0, %s167
      %s171 = sphi 0, %s170
      %s187 = sphi 0, %s171
    $region4: #{tpu_custom_call.1} parent=1 // loop_header_branch
      %19 = sbr.rel (%p17) target = $region8
    $region5: #{tpu_custom_call.1} parent=1 // loop_body
      %s21 = ssub.s32 %s16, 1
      %s22 = ssub.s32 %s16, 2
      %s23 = sadd.s32 %s16, 1
      %s24 = ssub.s32 %s16, %s23
      %p25 = scmp.eq.s32.totalorder %s24, 0
      %s27 = sadd.s32 %s26, 1
      %s28 = scalar_select %p25, %s26, %s27
      %p31 = pneg %p25
      %p32 = scmp.eq.s32.totalorder %s16, 1
      %p33 = por %p31, %p32
      %p34 = scmp.ne.s32.totalorder %s26, %s29
      %p35 = scmp.eq.s32.totalorder %s16, 0
      %p36 = por %p34, %p35
      %p37 = scmp.ne.s32.totalorder %s26, %s29
      %p38 = scmp.eq.s32.totalorder %s21, 1
      %p39 = por %p37, %p38
      %p40 = scmp.ne.s32.totalorder %s29, %s30
      %p41 = scmp.eq.s32.totalorder %s21, 0
      %p42 = por %p40, %p41
      %p43 = scmp.ne.s32.totalorder %s29, %s30
      %p44 = scmp.eq.s32.totalorder %s22, 1
      %p45 = por %p43, %p44
      %p47 = scmp.ne.s32.totalorder %s30, %s46
      %p48 = scmp.eq.s32.totalorder %s22, 0
      %p49 = por %p47, %p48
      %s50 = ssub.s32 %s16, %s23
      %p51 = scmp.eq.s32.totalorder %s50, 0
      %s53 = sadd.s32 %s52, 1
      %s54 = scalar_select %p51, %s52, %s53
      %p57 = pneg %p51
      %p58 = scmp.eq.s32.totalorder %s16, 1
      %p59 = por %p57, %p58
      %p60 = scmp.ne.s32.totalorder %s52, %s55
      %p61 = scmp.eq.s32.totalorder %s16, 0
      %p62 = por %p60, %p61
      %p63 = scmp.ne.s32.totalorder %s52, %s55
      %p64 = scmp.eq.s32.totalorder %s21, 1
      %p65 = por %p63, %p64
      %p66 = scmp.ne.s32.totalorder %s55, %s56
      %p67 = scmp.eq.s32.totalorder %s21, 0
      %p68 = por %p66, %p67
      %p69 = scmp.ne.s32.totalorder %s55, %s56
      %p70 = scmp.eq.s32.totalorder %s22, 1
      %p71 = por %p69, %p70
      %p73 = scmp.ne.s32.totalorder %s56, %s72
      %p74 = scmp.eq.s32.totalorder %s22, 0
      %p75 = por %p73, %p74
      %s77 = sadd.s32 %s76, 1
      %p80 = scmp.eq.s32.totalorder %s16, 1
      %p81 = scmp.ne.s32.totalorder %s76, %s78
      %p82 = scmp.eq.s32.totalorder %s16, 0
      %p83 = por %p81, %p82
      %p84 = scmp.ne.s32.totalorder %s76, %s78
      %p85 = scmp.eq.s32.totalorder %s21, 1
      %p86 = por %p84, %p85
      %p87 = scmp.ne.s32.totalorder %s78, %s79
      %p88 = scmp.eq.s32.totalorder %s21, 0
      %p89 = por %p87, %p88
      %p90 = scmp.ne.s32.totalorder %s78, %s79
      %p91 = scmp.eq.s32.totalorder %s22, 1
      %p92 = por %p90, %p91
      %p94 = scmp.ne.s32.totalorder %s79, %s93
      %p95 = scmp.eq.s32.totalorder %s22, 0
      %p96 = por %p94, %p95
      %s98 = sadd.s32 %s97, 1
      %p101 = scmp.eq.s32.totalorder %s16, 1
      %p102 = scmp.ne.s32.totalorder %s97, %s99
      %p103 = scmp.eq.s32.totalorder %s16, 0
      %p104 = por %p102, %p103
      %p105 = scmp.ne.s32.totalorder %s97, %s99
      %p106 = scmp.eq.s32.totalorder %s21, 1
      %p107 = por %p105, %p106
      %p108 = scmp.ne.s32.totalorder %s99, %s100
      %p109 = scmp.eq.s32.totalorder %s21, 0
      %p110 = por %p108, %p109
      %p111 = scmp.ne.s32.totalorder %s99, %s100
      %p112 = scmp.eq.s32.totalorder %s22, 1
      %p113 = por %p111, %p112
      %p115 = scmp.ne.s32.totalorder %s100, %s114
      %p116 = scmp.eq.s32.totalorder %s22, 0
      %p117 = por %p115, %p116
      %s119 = sadd.s32 %s118, 1
      %p122 = scmp.eq.s32.totalorder %s16, 1
      %p123 = scmp.ne.s32.totalorder %s118, %s120
      %p124 = scmp.eq.s32.totalorder %s16, 0
      %p125 = por %p123, %p124
      %p126 = scmp.ne.s32.totalorder %s118, %s120
      %p127 = scmp.eq.s32.totalorder %s21, 1
      %p128 = por %p126, %p127
      %p129 = scmp.ne.s32.totalorder %s120, %s121
      %p130 = scmp.eq.s32.totalorder %s21, 0
      %p131 = por %p129, %p130
      %p132 = scmp.ne.s32.totalorder %s120, %s121
      %p133 = scmp.eq.s32.totalorder %s22, 1
      %p134 = por %p132, %p133
      %p136 = scmp.ne.s32.totalorder %s121, %s135
      %p137 = scmp.eq.s32.totalorder %s22, 0
      %p138 = por %p136, %p137
      %s139 = ssub.s32 %s16, %s23
      %p140 = scmp.eq.s32.totalorder %s139, 0
      %s142 = sadd.s32 %s141, 1
      %s143 = scalar_select %p140, %s141, %s142
      %p146 = pneg %p140
      %p147 = scmp.eq.s32.totalorder %s16, 1
      %p148 = por %p146, %p147
      %p149 = scmp.ne.s32.totalorder %s141, %s144
      %p150 = scmp.eq.s32.totalorder %s16, 0
      %p151 = por %p149, %p150
      %p152 = scmp.ne.s32.totalorder %s141, %s144
      %p153 = scmp.eq.s32.totalorder %s21, 1
      %p154 = por %p152, %p153
      %p155 = scmp.ne.s32.totalorder %s144, %s145
      %p156 = scmp.eq.s32.totalorder %s21, 0
      %p157 = por %p155, %p156
      %p158 = scmp.ne.s32.totalorder %s144, %s145
      %p159 = scmp.eq.s32.totalorder %s22, 1
      %p160 = por %p158, %p159
      %p162 = scmp.ne.s32.totalorder %s145, %s161
      %p163 = scmp.eq.s32.totalorder %s22, 0
      %p164 = por %p162, %p163
      %s165 = ssub.s32 %s16, %s23
      %p166 = scmp.eq.s32.totalorder %s165, 0
      %s168 = sadd.s32 %s167, 1
      %s169 = scalar_select %p166, %s167, %s168
      %p172 = pneg %p166
      %p173 = scmp.eq.s32.totalorder %s16, 1
      %p174 = por %p172, %p173
      %p175 = scmp.ne.s32.totalorder %s167, %s170
      %p176 = scmp.eq.s32.totalorder %s16, 0
      %p177 = por %p175, %p176
      %p178 = scmp.ne.s32.totalorder %s167, %s170
      %p179 = scmp.eq.s32.totalorder %s21, 1
      %p180 = por %p178, %p179
      %p181 = scmp.ne.s32.totalorder %s170, %s171
      %p182 = scmp.eq.s32.totalorder %s21, 0
      %p183 = por %p181, %p182
      %p184 = scmp.ne.s32.totalorder %s170, %s171
      %p185 = scmp.eq.s32.totalorder %s22, 1
      %p186 = por %p184, %p185
      %p188 = scmp.ne.s32.totalorder %s171, %s187
      %p189 = scmp.eq.s32.totalorder %s22, 0
      %p190 = por %p188, %p189
      %p191 = scmp.le.s32.totalorder 1, %s16
      %p192 = scmp.lt.s32.totalorder %s16, 3
      %p193 = pnand %p191, %p192
      %p194 = pneg %p193
      // Predicated region
      $region9: #{tpu_custom_call.1} parent=5 // pred_check
        _
      $region10: #{tpu_custom_call.1} parent=5 // pred_check_branch
        %196 = sbr.rel (%p193) target = $region12
      $region11: #{tpu_custom_call.1} parent=5 // pred_region
        %s197 = ssub.s32 %s16, 1
        // Predicated region
        $region13: #{tpu_custom_call.1} parent=11 // pred_check
          %p198 = pneg %p89
        $region14: #{tpu_custom_call.1} parent=11 // pred_check_branch
          %200 = sbr.rel (%p198) target = $region16
        $region15: #{tpu_custom_call.1} parent=11 // pred_region
          %s202 = ssub.s32 96, 96
          %203 = vsyncadd [#allocation3], %s202
          %s204 = sshll.u32 [#allocation2], 4
          %s205 = int_to_ptr.vmem [resolvable:$true] %s204
          %210 = dma.hbm_to_vmem [thread:$0]  %s2, 96, %s205, [#allocation3], 32, 32, 2
        $region16: #{tpu_custom_call.1} parent=11 // pred_fallthru
          _
        // Predicated region
        $region17: #{tpu_custom_call.1} parent=11 // pred_check
          %p211 = pneg %p110
        $region18: #{tpu_custom_call.1} parent=11 // pred_check_branch
          %213 = sbr.rel (%p211) target = $region20
        $region19: #{tpu_custom_call.1} parent=11 // pred_region
          _
        $region20: #{tpu_custom_call.1} parent=11 // pred_fallthru
          _
        // Predicated region
        $region21: #{tpu_custom_call.1} parent=11 // pred_check
          %p214 = pneg %p131
        $region22: #{tpu_custom_call.1} parent=11 // pred_check_branch
          %216 = sbr.rel (%p214) target = $region24
        $region23: #{tpu_custom_call.1} parent=11 // pred_region
          _
        $region24: #{tpu_custom_call.1} parent=11 // pred_fallthru
          _
      $region12: #{tpu_custom_call.1} parent=5 // pred_fallthru
        _
      %p217 = scmp.lt.s32.totalorder %s16, 2
      // Predicated region
      $region25: #{tpu_custom_call.1} parent=5 // pred_check
        %p218 = pneg %p217
      $region26: #{tpu_custom_call.1} parent=5 // pred_check_branch
        %220 = sbr.rel (%p218) target = $region28
      $region27: #{tpu_custom_call.1} parent=5 // pred_region
        // Predicated region
        $region29: #{tpu_custom_call.1} parent=27 // pred_check
          %p221 = pneg %p36
        $region30: #{tpu_custom_call.1} parent=27 // pred_check_branch
          %223 = sbr.rel (%p221) target = $region32
        $region31: #{tpu_custom_call.1} parent=27 // pred_region
          %p224 = scmp.lt.s32.totalorder %s16, 1
          %s225 = scalar_select %p224, %s16, 1
          %s226 = smul.addr %s225, 3
          %s227 = smul.addr %s226, 4
          %s228 = scalar_lea.vmem %s0, %s227
        $region32: #{tpu_custom_call.1} parent=27 // pred_fallthru
          _
        // Predicated region
        $region33: #{tpu_custom_call.1} parent=27 // pred_check
          %p229 = pneg %p62
        $region34: #{tpu_custom_call.1} parent=27 // pred_check_branch
          %231 = sbr.rel (%p229) target = $region36
        $region35: #{tpu_custom_call.1} parent=27 // pred_region
          %p232 = scmp.lt.s32.totalorder %s16, 1
          %s233 = scalar_select %p232, %s16, 1
          %s234 = smul.addr %s233, 3
          %s235 = smul.addr %s234, 4
          %s236 = scalar_lea.vmem %s1, %s235
        $region36: #{tpu_custom_call.1} parent=27 // pred_fallthru
          _
        // Predicated region
        $region37: #{tpu_custom_call.1} parent=27 // pred_check
          %p237 = pneg %p151
        $region38: #{tpu_custom_call.1} parent=27 // pred_check_branch
          %239 = sbr.rel (%p237) target = $region40
        $region39: #{tpu_custom_call.1} parent=27 // pred_region
          %p240 = scmp.lt.s32.totalorder %s16, 1
          %s241 = scalar_select %p240, %s16, 1
          %s242 = smul.addr %s241, 2
          %s243 = smul.addr %s242, 8
          %s244 = scalar_lea.vmem %s5, %s243
        $region40: #{tpu_custom_call.1} parent=27 // pred_fallthru
          _
      $region28: #{tpu_custom_call.1} parent=5 // pred_fallthru
        _
      %p245 = scmp.le.s32.totalorder 1, %s16
      %p246 = scmp.lt.s32.totalorder %s16, 3
      %p247 = pnand %p245, %p246
      %p248 = pneg %p247
      // Predicated region
      $region41: #{tpu_custom_call.1} parent=5 // pred_check
        _
      $region42: #{tpu_custom_call.1} parent=5 // pred_check_branch
        %250 = sbr.rel (%p247) target = $region44
      $region43: #{tpu_custom_call.1} parent=5 // pred_region
        %s251 = ssub.s32 %s16, 1
        // Predicated region
        $region45: #{tpu_custom_call.1} parent=43 // pred_check
          %p252 = pneg %p89
        $region46: #{tpu_custom_call.1} parent=43 // pred_check_branch
          %254 = sbr.rel (%p252) target = $region48
        $region47: #{tpu_custom_call.1} parent=43 // pred_region
          %255 = dma.done [#allocation3], 96
        $region48: #{tpu_custom_call.1} parent=43 // pred_fallthru
          _
        %p256 = scmp.lt.s32.totalorder %s21, 1
        %s257 = scalar_select %p256, %s21, 1
        %s258 = smul.addr %s257, 3
        %s259 = smul.addr %s258, 4
        %s260 = scalar_lea.vmem %s0, %s259
        %p261 = pneg %p42
        %p262 = pneg %p39
        %p263 = scmp.lt.s32.totalorder %s21, 1
        %s264 = scalar_select %p263, %s21, 1
        %s265 = smul.addr %s264, 3
        %s266 = smul.addr %s265, 4
        %s267 = scalar_lea.vmem %s1, %s266
        %p268 = pneg %p68
        %p269 = pneg %p65
        %p270 = pneg %p89
        %p271 = pneg %p86
        %p272 = pneg %p110
        %p273 = pneg %p107
        %p274 = pneg %p131
        %p275 = pneg %p128
        %p276 = scmp.lt.s32.totalorder %s21, 1
        %s277 = scalar_select %p276, %s21, 1
        %s278 = smul.addr %s277, 2
        %s279 = smul.addr %s278, 8
        %s280 = scalar_lea.vmem %s5, %s279
        %p281 = pneg %p157
        %p282 = pneg %p154
        %p283 = pneg %p183
        %p284 = pneg %p180
        %s285 = sand.u32 %s170, 1
        %s286 = scalar_lea.sflag [#allocation4], %s285
        %s287 = sand.u32 %s170, 1
        %s288 = smul.addr %s287, 16
        %s289 = scalar_lea.vmem [#allocation5], %s288
        %p290 = scmp.lt.s32.totalorder %s21, 1
        %s291 = scalar_select %p290, %s21, 1
        %s292 = smul.addr %s291, 3
        %s293 = smul.addr %s292, 4
        %s294 = scalar_lea.vmem %s0, %s293
        %p295 = scmp.lt.s32.totalorder %s21, 1
        %s296 = scalar_select %p295, %s21, 1
        %s297 = smul.addr %s296, 3
        %s298 = smul.addr %s297, 4
        %s299 = scalar_lea.vmem %s1, %s298
        %p300 = scmp.lt.s32.totalorder %s21, 1
        %s301 = scalar_select %p300, %s21, 1
        %s302 = smul.addr %s301, 2
        %s303 = smul.addr %s302, 8
        %s304 = scalar_lea.vmem %s5, %s303
        %v306 = vld [vmem:[%s294] sm:$0xf]
        %v307 = vld [vmem:[%s294 + $0x4] sm:$0xf]
        %v308 = vld [vmem:[%s294 + $0x8] sm:$0x1]
        %v309 = vld [vmem:[%s299] sm:$0xf]
        %v310 = vld [vmem:[%s299 + $0x4] sm:$0xf]
        %v311 = vld [vmem:[%s299 + $0x8] sm:$0x1]
        %v312 = vld [vmem:[#allocation2] sm:$0x3]
        %v313 = vld [vmem:[%s3] sm:$0xf]
        %v314 = vld [vmem:[%s3 + $0x4] sm:$0xf]
        %v315 = vld [vmem:[%s3 + $0x8] sm:$0xf]
        %v316 = vld [vmem:[%s3 + $0xc] sm:$0xf]
        %v319 = vunpack.c.l.b16 %v309
        %v320 = vunpack.c.l.b16 %v310
        %v321 = vpack.c.b16 %v320, %v319
        %v326 = vunpack.c.l.b16 %v313
        %v327 = vunpack.c.l.b16 %v314
        %v328 = vunpack.c.l.b16 %v315
        %v329 = vunpack.c.l.b16 %v316
        %v330 = vpack.c.b16 %v327, %v326
        %v331 = vpack.c.b16 %v329, %v328
        %vm334 = vcmask 261120
        %v336 = vsel %vm334, %v321, 0
        %338 = vmatprep.subr.bf16.mxu0 0
        %339 = vmatpush1.bf16.msra.mxu0 %v330
        %340 = vmatprep.subr.bf16.mxu0 0
        %341 = vmatpush1.bf16.msra.mxu0 %v331
        %342 = vmatprep.subr.bf16.mxu0 0
        %343 = vmatpush1.bf16.msra.mxu0 0
        %344 = vmatprep.subr.bf16.mxu0 0
        %345 = vmatpush1.bf16.msra.mxu0 0
        %346 = vmatprep.subr.bf16.mxu0 0
        %347 = vmatpush1.bf16.msra.mxu0 0
        %348 = vmatprep.subr.bf16.mxu0 0
        %349 = vmatpush1.bf16.msra.mxu0 0
        %350 = vmatprep.subr.bf16.mxu0 0
        %351 = vmatpush1.bf16.msra.mxu0 0
        %352 = vmatprep.subr.bf16.mxu0 0
        %353 = vmatpush1.bf16.msra.mxu0 0
        %354 = vmatprep.subr.bf16.mxu0 0
        %355 = vmatpush1.bf16.msra.mxu0 0
        %356 = vmatprep.subr.bf16.mxu0 0
        %357 = vmatpush1.bf16.msra.mxu0 0
        %358 = vmatprep.subr.bf16.mxu0 0
        %359 = vmatpush1.bf16.msra.mxu0 0
        %360 = vmatprep.subr.bf16.mxu0 0
        %361 = vmatpush1.bf16.msra.mxu0 0
        %362 = vmatprep.subr.bf16.mxu0 0
        %363 = vmatpush1.bf16.msra.mxu0 0
        %364 = vmatprep.subr.bf16.mxu0 0
        %365 = vmatpush1.bf16.msra.mxu0 0
        %366 = vmatprep.subr.bf16.mxu0 0
        %367 = vmatpush1.bf16.msra.mxu0 0
        %368 = vmatprep.subr.bf16.mxu0 0
        %369 = vmatpush1.bf16.msra.mxu0 0
        %370 = vmatprep.mubr.bf16.mxu0 0
        %371 = vmatmul.mubr.bf16.gmra.mrb[0].mxu0 %v336
        %v372 = vpop.f32.mrb[0].mxu0
        %v373 = vadd.f32 0.0, %v372
        %v374 = vpop.f32.mrb[0].mxu0
        %v375 = vpop.f32.mrb[0].mxu0
        %v376 = vadd.f32 0.0, %v375
        %v377 = vpop.f32.mrb[0].mxu0
        %378 = vdwg.mxu0
        %v381 = vunpack.c.l.b16 %v306
        %v382 = vunpack.c.l.b16 %v307
        %v383 = vpack.c.b16 %v382, %v381
        %vm384 = vcmask 31744
        %v386 = vsel %vm384, %v383, 0
        %vm388 = vcmask 1041408
        %v390 = vsel %vm388, %v312, 0
        %392 = vmatprep.subr.bf16.mxu0 0
        %393 = vmatpush1.bf16.msra.mxu0 %v390
        %394 = vmatprep.subr.bf16.mxu0 0
        %395 = vmatpush1.bf16.msra.mxu0 0
        %396 = vmatprep.subr.bf16.mxu0 0
        %397 = vmatpush1.bf16.msra.mxu0 0
        %398 = vmatprep.subr.bf16.mxu0 0
        %399 = vmatpush1.bf16.msra.mxu0 0
        %400 = vmatprep.subr.bf16.mxu0 0
        %401 = vmatpush1.bf16.msra.mxu0 0
        %402 = vmatprep.subr.bf16.mxu0 0
        %403 = vmatpush1.bf16.msra.mxu0 0
        %404 = vmatprep.subr.bf16.mxu0 0
        %405 = vmatpush1.bf16.msra.mxu0 0
        %406 = vmatprep.subr.bf16.mxu0 0
        %407 = vmatpush1.bf16.msra.mxu0 0
        %408 = vmatprep.subr.bf16.mxu0 0
        %409 = vmatpush1.bf16.msra.mxu0 0
        %410 = vmatprep.subr.bf16.mxu0 0
        %411 = vmatpush1.bf16.msra.mxu0 0
        %412 = vmatprep.subr.bf16.mxu0 0
        %413 = vmatpush1.bf16.msra.mxu0 0
        %414 = vmatprep.subr.bf16.mxu0 0
        %415 = vmatpush1.bf16.msra.mxu0 0
        %416 = vmatprep.subr.bf16.mxu0 0
        %417 = vmatpush1.bf16.msra.mxu0 0
        %418 = vmatprep.subr.bf16.mxu0 0
        %419 = vmatpush1.bf16.msra.mxu0 0
        %420 = vmatprep.subr.bf16.mxu0 0
        %421 = vmatpush1.bf16.msra.mxu0 0
        %422 = vmatprep.subr.bf16.mxu0 0
        %423 = vmatpush1.bf16.msra.mxu0 0
        %424 = vmatprep.mubr.bf16.mxu0 0
        %425 = vmatmul.mubr.bf16.gmra.mrb[0].mxu0 %v386
        %v426 = vpop.f32.mrb[0].mxu0
        %v427 = vadd.f32 %v373, %v426
        %v428 = vpop.f32.mrb[0].mxu0
        %v429 = vpop.f32.mrb[0].mxu0
        %v430 = vadd.f32 %v376, %v429
        %v431 = vpop.f32.mrb[0].mxu0
        %432 = vdwg.mxu0
        %s433 = scalar_lea.vmem [#allocation2], 2
        %v434 = vld [vmem:[%s433] sm:$0x3]
        %v436 = vunpack.c.l.b16 %v308
        %v437 = vpack.c.b16 %v436, %v436
        %vm438 = vsmask.f32 7424
        %v439 = vshrl.u32 %v383, 16
        %v441 = vshll.u32 %v383, 16
        %v443 = vrot.slane %v441, 1
        %v444 = vor.u32 %v439, %v443
        %v446 = vshll.u32 %v437, 16
        %v448 = vrot.slane %v446, 1
        %v449 = vsel %vm438, %v444, %v448
        %v451 = vsel %vm384, %v449, 0
        %v454 = vsel %vm388, %v434, 0
        %456 = vmatprep.subr.bf16.mxu0 0
        %457 = vmatpush1.bf16.msra.mxu0 %v454
        %458 = vmatprep.subr.bf16.mxu0 0
        %459 = vmatpush1.bf16.msra.mxu0 0
        %460 = vmatprep.subr.bf16.mxu0 0
        %461 = vmatpush1.bf16.msra.mxu0 0
        %462 = vmatprep.subr.bf16.mxu0 0
        %463 = vmatpush1.bf16.msra.mxu0 0
        %464 = vmatprep.subr.bf16.mxu0 0
        %465 = vmatpush1.bf16.msra.mxu0 0
        %466 = vmatprep.subr.bf16.mxu0 0
        %467 = vmatpush1.bf16.msra.mxu0 0
        %468 = vmatprep.subr.bf16.mxu0 0
        %469 = vmatpush1.bf16.msra.mxu0 0
        %470 = vmatprep.subr.bf16.mxu0 0
        %471 = vmatpush1.bf16.msra.mxu0 0
        %472 = vmatprep.subr.bf16.mxu0 0
        %473 = vmatpush1.bf16.msra.mxu0 0
        %474 = vmatprep.subr.bf16.mxu0 0
        %475 = vmatpush1.bf16.msra.mxu0 0
        %476 = vmatprep.subr.bf16.mxu0 0
        %477 = vmatpush1.bf16.msra.mxu0 0
        %478 = vmatprep.subr.bf16.mxu0 0
        %479 = vmatpush1.bf16.msra.mxu0 0
        %480 = vmatprep.subr.bf16.mxu0 0
        %481 = vmatpush1.bf16.msra.mxu0 0
        %482 = vmatprep.subr.bf16.mxu0 0
        %483 = vmatpush1.bf16.msra.mxu0 0
        %484 = vmatprep.subr.bf16.mxu0 0
        %485 = vmatpush1.bf16.msra.mxu0 0
        %486 = vmatprep.subr.bf16.mxu0 0
        %487 = vmatpush1.bf16.msra.mxu0 0
        %488 = vmatprep.mubr.bf16.mxu0 0
        %489 = vmatmul.mubr.bf16.gmra.mrb[0].mxu0 %v451
        %v490 = vpop.f32.mrb[0].mxu0
        %v491 = vadd.f32 0.0, %v490
        %v492 = vpop.f32.mrb[0].mxu0
        %v493 = vpop.f32.mrb[0].mxu0
        %v494 = vadd.f32 0.0, %v493
        %v495 = vpop.f32.mrb[0].mxu0
        %496 = vdwg.mxu0
        %v497 = vadd.f32 %v427, %v491
        %v498 = vadd.f32 %v430, %v494
        %s499 = scalar_lea.vmem %s3, 16
        %v500 = vld [vmem:[%s499] sm:$0xf]
        %v501 = vld [vmem:[%s499 + $0x4] sm:$0xf]
        %v502 = vld [vmem:[%s499 + $0x8] sm:$0xf]
        %v503 = vld [vmem:[%s499 + $0xc] sm:$0xf]
        %v505 = vunpack.c.l.b16 %v311
        %v506 = vpack.c.b16 %v505, %v505
        %v507 = vshrl.u32 %v321, 16
        %v509 = vshll.u32 %v321, 16
        %v511 = vrot.slane %v509, 1
        %v512 = vor.u32 %v507, %v511
        %v514 = vshll.u32 %v506, 16
        %v516 = vrot.slane %v514, 1
        %v517 = vsel %vm438, %v512, %v516
        %v522 = vunpack.c.l.b16 %v500
        %v523 = vunpack.c.l.b16 %v501
        %v524 = vunpack.c.l.b16 %v502
        %v525 = vunpack.c.l.b16 %v503
        %v526 = vpack.c.b16 %v523, %v522
        %v527 = vpack.c.b16 %v525, %v524
        %v531 = vsel %vm334, %v517, 0
        %533 = vmatprep.subr.bf16.mxu0 0
        %534 = vmatpush1.bf16.msra.mxu0 %v526
        %535 = vmatprep.subr.bf16.mxu0 0
        %536 = vmatpush1.bf16.msra.mxu0 %v527
        %537 = vmatprep.subr.bf16.mxu0 0
        %538 = vmatpush1.bf16.msra.mxu0 0
        %539 = vmatprep.subr.bf16.mxu0 0
        %540 = vmatpush1.bf16.msra.mxu0 0
        %541 = vmatprep.subr.bf16.mxu0 0
        %542 = vmatpush1.bf16.msra.mxu0 0
        %543 = vmatprep.subr.bf16.mxu0 0
        %544 = vmatpush1.bf16.msra.mxu0 0
        %545 = vmatprep.subr.bf16.mxu0 0
        %546 = vmatpush1.bf16.msra.mxu0 0
        %547 = vmatprep.subr.bf16.mxu0 0
        %548 = vmatpush1.bf16.msra.mxu0 0
        %549 = vmatprep.subr.bf16.mxu0 0
        %550 = vmatpush1.bf16.msra.mxu0 0
        %551 = vmatprep.subr.bf16.mxu0 0
        %552 = vmatpush1.bf16.msra.mxu0 0
        %553 = vmatprep.subr.bf16.mxu0 0
        %554 = vmatpush1.bf16.msra.mxu0 0
        %555 = vmatprep.subr.bf16.mxu0 0
        %556 = vmatpush1.bf16.msra.mxu0 0
        %557 = vmatprep.subr.bf16.mxu0 0
        %558 = vmatpush1.bf16.msra.mxu0 0
        %559 = vmatprep.subr.bf16.mxu0 0
        %560 = vmatpush1.bf16.msra.mxu0 0
        %561 = vmatprep.subr.bf16.mxu0 0
        %562 = vmatpush1.bf16.msra.mxu0 0
        %563 = vmatprep.subr.bf16.mxu0 0
        %564 = vmatpush1.bf16.msra.mxu0 0
        %565 = vmatprep.mubr.bf16.mxu0 0
        %566 = vmatmul.mubr.bf16.gmra.mrb[0].mxu0 %v531
        %v567 = vpop.f32.mrb[0].mxu0
        %v568 = vadd.f32 0.0, %v567
        %v569 = vpop.f32.mrb[0].mxu0
        %v570 = vpop.f32.mrb[0].mxu0
        %v571 = vadd.f32 0.0, %v570
        %v572 = vpop.f32.mrb[0].mxu0
        %573 = vdwg.mxu0
        %v574 = vadd.f32 %v497, %v568
        %v575 = vadd.f32 %v498, %v571
        %s576 = scalar_lea.vmem [#allocation2], 4
        %v577 = vld [vmem:[%s576] sm:$0x3]
        %vm578 = vcmask 1046528
        %v579 = vrot.slane %v383, 1
        %v580 = vrot.slane %v437, 1
        %v581 = vsel %vm578, %v579, %v580
        %v583 = vsel %vm384, %v581, 0
        %v586 = vsel %vm388, %v577, 0
        %588 = vmatprep.subr.bf16.mxu0 0
        %589 = vmatpush1.bf16.msra.mxu0 %v586
        %590 = vmatprep.subr.bf16.mxu0 0
        %591 = vmatpush1.bf16.msra.mxu0 0
        %592 = vmatprep.subr.bf16.mxu0 0
        %593 = vmatpush1.bf16.msra.mxu0 0
        %594 = vmatprep.subr.bf16.mxu0 0
        %595 = vmatpush1.bf16.msra.mxu0 0
        %596 = vmatprep.subr.bf16.mxu0 0
        %597 = vmatpush1.bf16.msra.mxu0 0
        %598 = vmatprep.subr.bf16.mxu0 0
        %599 = vmatpush1.bf16.msra.mxu0 0
        %600 = vmatprep.subr.bf16.mxu0 0
        %601 = vmatpush1.bf16.msra.mxu0 0
        %602 = vmatprep.subr.bf16.mxu0 0
        %603 = vmatpush1.bf16.msra.mxu0 0
        %604 = vmatprep.subr.bf16.mxu0 0
        %605 = vmatpush1.bf16.msra.mxu0 0
        %606 = vmatprep.subr.bf16.mxu0 0
        %607 = vmatpush1.bf16.msra.mxu0 0
        %608 = vmatprep.subr.bf16.mxu0 0
        %609 = vmatpush1.bf16.msra.mxu0 0
        %610 = vmatprep.subr.bf16.mxu0 0
        %611 = vmatpush1.bf16.msra.mxu0 0
        %612 = vmatprep.subr.bf16.mxu0 0
        %613 = vmatpush1.bf16.msra.mxu0 0
        %614 = vmatprep.subr.bf16.mxu0 0
        %615 = vmatpush1.bf16.msra.mxu0 0
        %616 = vmatprep.subr.bf16.mxu0 0
        %617 = vmatpush1.bf16.msra.mxu0 0
        %618 = vmatprep.subr.bf16.mxu0 0
        %619 = vmatpush1.bf16.msra.mxu0 0
        %620 = vmatprep.mubr.bf16.mxu0 0
        %621 = vmatmul.mubr.bf16.gmra.mrb[0].mxu0 %v583
        %v622 = vpop.f32.mrb[0].mxu0
        %v623 = vadd.f32 0.0, %v622
        %v624 = vpop.f32.mrb[0].mxu0
        %v625 = vpop.f32.mrb[0].mxu0
        %v626 = vadd.f32 0.0, %v625
        %v627 = vpop.f32.mrb[0].mxu0
        %628 = vdwg.mxu0
        %v629 = vadd.f32 %v574, %v623
        %v630 = vadd.f32 %v575, %v626
        %s631 = scalar_lea.vmem %s3, 32
        %v632 = vld [vmem:[%s631] sm:$0xf]
        %v633 = vld [vmem:[%s631 + $0x4] sm:$0xf]
        %v634 = vld [vmem:[%s631 + $0x8] sm:$0xf]
        %v635 = vld [vmem:[%s631 + $0xc] sm:$0xf]
        %v636 = vrot.slane %v321, 1
        %v637 = vrot.slane %v506, 1
        %v638 = vsel %vm578, %v636, %v637
        %v643 = vunpack.c.l.b16 %v632
        %v644 = vunpack.c.l.b16 %v633
        %v645 = vunpack.c.l.b16 %v634
        %v646 = vunpack.c.l.b16 %v635
        %v647 = vpack.c.b16 %v644, %v643
        %v648 = vpack.c.b16 %v646, %v645
        %v652 = vsel %vm334, %v638, 0
        %654 = vmatprep.subr.bf16.mxu0 0
        %655 = vmatpush1.bf16.msra.mxu0 %v647
        %656 = vmatprep.subr.bf16.mxu0 0
        %657 = vmatpush1.bf16.msra.mxu0 %v648
        %658 = vmatprep.subr.bf16.mxu0 0
        %659 = vmatpush1.bf16.msra.mxu0 0
        %660 = vmatprep.subr.bf16.mxu0 0
        %661 = vmatpush1.bf16.msra.mxu0 0
        %662 = vmatprep.subr.bf16.mxu0 0
        %663 = vmatpush1.bf16.msra.mxu0 0
        %664 = vmatprep.subr.bf16.mxu0 0
        %665 = vmatpush1.bf16.msra.mxu0 0
        %666 = vmatprep.subr.bf16.mxu0 0
        %667 = vmatpush1.bf16.msra.mxu0 0
        %668 = vmatprep.subr.bf16.mxu0 0
        %669 = vmatpush1.bf16.msra.mxu0 0
        %670 = vmatprep.subr.bf16.mxu0 0
        %671 = vmatpush1.bf16.msra.mxu0 0
        %672 = vmatprep.subr.bf16.mxu0 0
        %673 = vmatpush1.bf16.msra.mxu0 0
        %674 = vmatprep.subr.bf16.mxu0 0
        %675 = vmatpush1.bf16.msra.mxu0 0
        %676 = vmatprep.subr.bf16.mxu0 0
        %677 = vmatpush1.bf16.msra.mxu0 0
        %678 = vmatprep.subr.bf16.mxu0 0
        %679 = vmatpush1.bf16.msra.mxu0 0
        %680 = vmatprep.subr.bf16.mxu0 0
        %681 = vmatpush1.bf16.msra.mxu0 0
        %682 = vmatprep.subr.bf16.mxu0 0
        %683 = vmatpush1.bf16.msra.mxu0 0
        %684 = vmatprep.subr.bf16.mxu0 0
        %685 = vmatpush1.bf16.msra.mxu0 0
        %686 = vmatprep.mubr.bf16.mxu0 0
        %687 = vmatmul.mubr.bf16.gmra.mrb[0].mxu0 %v652
        %v688 = vpop.f32.mrb[0].mxu0
        %v689 = vadd.f32 0.0, %v688
        %v690 = vpop.f32.mrb[0].mxu0
        %v691 = vpop.f32.mrb[0].mxu0
        %v692 = vadd.f32 0.0, %v691
        %v693 = vpop.f32.mrb[0].mxu0
        %694 = vdwg.mxu0
        %v695 = vadd.f32 %v629, %v689
        %v696 = vadd.f32 %v630, %v692
        %v697 = vld [vmem:[%s4] sm:$0x1]
        %v699 = vlaneseq
        %v700 = vshrl.u32 %v699, 7
        %v701 = vsub.s32 0, %v700
        %v702 = vrot.slane %v697, %v701
        %v704 = vadd.f32 %v695, %v702
        %v705 = vadd.f32 %v696, %v702
        %v706 = vtanh.pop %v704
        %v707 = vtanh.pop %v705
        %v708 = vmul.f32 %v706, 0.5
        %v709 = vmul.f32 %v707, 0.5
        %v710 = vadd.f32 %v708, 0.5
        %v711 = vadd.f32 %v709, 0.5
        %v712 = vld [vmem:[%s304] sm:$0xff]
        %v713 = vld [vmem:[%s304 + $0x8] sm:$0xff]
        %716 = vrot.lane.b32.xlu0 %v712, 32
        %v717 = vpop.permute.xlu0 %716
        %718 = vrot.lane.b32.xlu0 %v713, 32
        %v719 = vpop.permute.xlu0 %718
        %v722 = vmul.f32 %v710, %v717
        %v723 = vmul.f32 %v711, %v719
        %726 = vrot.lane.b32.xlu0 %v706, 32
        %v727 = vpop.permute.xlu0 %726
        %728 = vrot.lane.b32.xlu0 %v707, 32
        %v729 = vpop.permute.xlu0 %728
        %v732 = vmul.f32 %v710, %v727
        %v733 = vmul.f32 %v711, %v729
        %736 = vrot.lane.b32.xlu0 %v732, 32
        %v737 = vpop.permute.xlu0 %736
        %738 = vrot.lane.b32.xlu0 %v733, 32
        %v739 = vpop.permute.xlu0 %738
        %v742 = vadd.f32 %v722, %v737
        %v743 = vadd.f32 %v723, %v739
        %v744 = vtanh.pop %v742
        %v745 = vtanh.pop %v743
        %748 = vrot.lane.b32.xlu0 %v744, 32
        %v749 = vpop.permute.xlu0 %748
        %750 = vrot.lane.b32.xlu0 %v745, 32
        %v751 = vpop.permute.xlu0 %750
        %v754 = vmul.f32 %v710, %v749
        %v755 = vmul.f32 %v711, %v751
        %758 = vrot.lane.b32.xlu0 %v754, 64
        %v759 = vpop.permute.xlu0 %758
        %760 = vrot.lane.b32.xlu0 %v755, 64
        %v761 = vpop.permute.xlu0 %760
        %v764 = vsel %vm334, %v759, %v742
        %v765 = vsel %vm334, %v761, %v743
        %vm766 = vcmask 523264
        %767 = vst.msk [vmem:[%s289] sm:$0xff] %vm766, %v764
        %768 = vst.msk [vmem:[%s289 + $0x8] sm:$0xff] %vm766, %v765
        %s769 = sand.u32 %s170, 1
        %s770 = scalar_lea.sflag [#allocation4], %s769
        %s771 = sand.u32 %s170, 1
        %s772 = smul.addr %s771, 16
        %s773 = scalar_lea.vmem [#allocation5], %s772
        // Predicated region
        $region49: #{tpu_custom_call.1} parent=43 // pred_check
          %p774 = pneg %p180
        $region50: #{tpu_custom_call.1} parent=43 // pred_check_branch
          %776 = sbr.rel (%p774) target = $region52
        $region51: #{tpu_custom_call.1} parent=43 // pred_region
          %s778 = ssub.s32 256, 256
          %779 = vsyncadd %s770, %s778
          %s780 = smul.addr %s21, 2
          %s781 = smul.addr %s780, 128
          %s782 = scalar_lea.hbm %s6, %s781
          %s783 = sshll.u32 %s773, 4
          %s784 = int_to_ptr.vmem [resolvable:$true] %s783
          %789 = dma.vmem_to_hbm [thread:$0]  %s784, 256, %s782, %s770, 128, 128, 8
        $region52: #{tpu_custom_call.1} parent=43 // pred_fallthru
          _
      $region44: #{tpu_custom_call.1} parent=5 // pred_fallthru
        _
      %p790 = scmp.le.s32.totalorder 2, %s16
      // Predicated region
      $region53: #{tpu_custom_call.1} parent=5 // pred_check
        %p791 = pneg %p790
      $region54: #{tpu_custom_call.1} parent=5 // pred_check_branch
        %793 = sbr.rel (%p791) target = $region56
      $region55: #{tpu_custom_call.1} parent=5 // pred_region
        %s794 = ssub.s32 %s16, 2
        // Predicated region
        $region57: #{tpu_custom_call.1} parent=55 // pred_check
          %p795 = pneg %p186
        $region58: #{tpu_custom_call.1} parent=55 // pred_check_branch
          %797 = sbr.rel (%p795) target = $region60
        $region59: #{tpu_custom_call.1} parent=55 // pred_region
          %s798 = sand.u32 %s171, 1
          %s799 = scalar_lea.sflag [#allocation4], %s798
          %s800 = sand.u32 %s171, 1
          %s801 = smul.addr %s800, 16
          %s802 = scalar_lea.vmem [#allocation5], %s801
          %803 = dma.done %s799, 256
        $region60: #{tpu_custom_call.1} parent=55 // pred_fallthru
          _
      $region56: #{tpu_custom_call.1} parent=5 // pred_fallthru
        _
    $region6: #{tpu_custom_call.1} parent=1 // loop_footer
      %s20 = sadd.s32 1, %s16
    $region7: #{tpu_custom_call.1} parent=1 // loop_footer_branch
      %15 = sbr.rel target = $region3
    $region8: #{tpu_custom_call.1} parent=1 // loop_exit
      _
    %804 = vsyncpa [#allocation3], 1
    %s805 = scalar_lea.sflag [#allocation3], 1
    %806 = vsyncpa %s805, 1
    %807 = vsyncpa [#allocation4], 1
    %s808 = scalar_lea.sflag [#allocation4], 1
    %809 = vsyncpa %s808, 1

</llo_original>
